<compile_context>
chip_gen: v6e
topology: v6e:2x2x1
jax: 0.10.0
libtpu: 0.0.40
codegen_flags: <defaults>
</compile_context>

<pallas_src>
import functools

import jax
import jax.numpy as jnp
from jax.experimental import pallas as pl
from jax.experimental.pallas import tpu as pltpu


def _round_up(x, m):
    return ((x + m - 1) // m) * m


# ---------------------------------------------------------------------------
# Kernel 1: tiled dense layer  y = x @ Wt + b   (Wt already transposed)
# ---------------------------------------------------------------------------
def _linear_kernel(x_ref, w_ref, b_ref, o_ref, acc_ref):
    @pl.when(pl.program_id(2) == 0)
    def _init():
        acc_ref[...] = jnp.zeros_like(acc_ref)

    acc_ref[...] += jnp.dot(x_ref[...], w_ref[...],
                            preferred_element_type=jnp.float32)

    @pl.when(pl.program_id(2) == pl.num_programs(2) - 1)
    def _flush():
        o_ref[...] = (acc_ref[...] + b_ref[...]).astype(o_ref.dtype)


def pallas_linear(x, w_t, b, out_dtype=jnp.float32):
    """x: (M, K), w_t: (K, N), b: (N,) f32 -> (M, N) out_dtype."""
    M, K = x.shape
    N = w_t.shape[1]

    def pick(d, opts, align):
        for t in opts:
            if d >= t:
                return t
        return _round_up(d, align)

    tm = pick(M, (512, 256), 8)
    tn = pick(N, (512, 256), 128)
    tk = pick(K, (1024, 512), 128)
    Mp, Np, Kp = _round_up(M, tm), _round_up(N, tn), _round_up(K, tk)

    xb = jnp.pad(x.astype(jnp.bfloat16), ((0, Mp - M), (0, Kp - K)))
    wb = jnp.pad(w_t.astype(jnp.bfloat16), ((0, Kp - K), (0, Np - N)))
    bb = jnp.pad(b.astype(jnp.float32), (0, Np - N)).reshape(1, Np)

    out = pl.pallas_call(
        _linear_kernel,
        out_shape=jax.ShapeDtypeStruct((Mp, Np), out_dtype),
        grid=(Mp // tm, Np // tn, Kp // tk),
        in_specs=[
            pl.BlockSpec((tm, tk), lambda i, j, k: (i, k)),
            pl.BlockSpec((tk, tn), lambda i, j, k: (k, j)),
            pl.BlockSpec((1, tn), lambda i, j, k: (0, j)),
        ],
        out_specs=pl.BlockSpec((tm, tn), lambda i, j, k: (i, j)),
        scratch_shapes=[pltpu.VMEM((tm, tn), jnp.float32)],
        compiler_params=pltpu.CompilerParams(
            dimension_semantics=("parallel", "parallel", "arbitrary"),
            vmem_limit_bytes=48 * 1024 * 1024),
    )(xb, wb, bb)
    return out[:M, :N]


# ---------------------------------------------------------------------------
# Kernel 2: flash-attention SDPA on token-major (B, T, H*d_k) tensors.
# One grid step processes (batch b, head group g, q tile qi, kv tile ki).
# Online-softmax stats (m, l) and the concat-heads accumulator live in VMEM
# scratch; the epilogue does ONE lane-dense store of the (tq, hg*d_k) block.
# ---------------------------------------------------------------------------
def _flash_kernel(q_ref, k_ref, v_ref, o_ref, m_sc, l_sc, acc_sc, *,
                  hg, d_k, tkv, t_k, mask_kv):
    ki = pl.program_id(3)

    @pl.when(ki == 0)
    def _init():
        m_sc[...] = jnp.full_like(m_sc, -jnp.inf)
        l_sc[...] = jnp.zeros_like(l_sc)
        acc_sc[...] = jnp.zeros_like(acc_sc)

    if mask_kv:
        col = jax.lax.broadcasted_iota(jnp.int32, (1, tkv), 1) + ki * tkv
        bias = jnp.where(col < t_k, 0.0, -1e30).astype(jnp.float32)  # (1, tkv)

    # Static per-head loop: plain 2-D dot_generals, no in-kernel transposes.
    for h in range(hg):
        c0, c1 = h * d_k, (h + 1) * d_k
        q_h = q_ref[:, c0:c1]            # (tq,  d_k) bf16, pre-scaled via Wq
        k_h = k_ref[:, c0:c1]            # (tkv, d_k) bf16
        v_h = v_ref[:, c0:c1]            # (tkv, d_k) bf16

        # s = q @ k^T, contraction on the last axis of both (MXU-native form).
        s = jax.lax.dot_general(q_h, k_h, (((1,), (1,)), ((), ())),
                                preferred_element_type=jnp.float32)  # (tq, tkv)
        if mask_kv:
            s = s + bias

        m_prev = m_sc[h]                                         # (tq, 1)
        m_new = jnp.maximum(m_prev, jnp.max(s, axis=-1, keepdims=True))
        alpha = jnp.exp(m_prev - m_new)
        p = jnp.exp(s - m_new)                                   # f32 (stable on v5e too)
        l_sc[h] = alpha * l_sc[h] + jnp.sum(p, axis=-1, keepdims=True)
        pv = jax.lax.dot_general(p.astype(v_h.dtype), v_h,
                                 (((1,), (0,)), ((), ())),
                                 preferred_element_type=jnp.float32)  # (tq, d_k)
        acc_sc[:, c0:c1] = alpha * acc_sc[:, c0:c1] + pv
        m_sc[h] = m_new

    @pl.when(ki == pl.num_programs(3) - 1)
    def _finalize():
        for h in range(hg):
            c0, c1 = h * d_k, (h + 1) * d_k
            acc_sc[:, c0:c1] = acc_sc[:, c0:c1] * pl.reciprocal(l_sc[h])
        # Single full-width lane-dense store of the concat-heads slab.
        o_ref[...] = acc_sc[...].astype(o_ref.dtype)


def _pick_head_group(num_heads, d_k):
    """Smallest head group whose lane width is a multiple of 128; else all heads
    (block then spans the full d_model last dim, which is always legal)."""
    for hg in range(1, num_heads + 1):
        if num_heads % hg == 0 and (hg * d_k) % 128 == 0:
            return hg
    return num_heads


def pallas_flash_attention(qp, kp, vp, num_heads):
    """qp: (B, T_q, d_model) bf16 (Q already scaled by 1/sqrt(d_k) via weights);
    kp, vp: (B, T_k, d_model) bf16.  Returns (B, T_q, d_model) bf16, heads
    concatenated along the last axis (same layout as the inputs)."""
    B, T_q, d_model = qp.shape
    T_k = kp.shape[1]
    d_k = d_model // num_heads
    hg = _pick_head_group(num_heads, d_k)
    gw = hg * d_k                                # head-group lane width

    tq = min(512, _round_up(T_q, 8))
    tkv = min(512, _round_up(T_k, 8))
    T_q_pad = _round_up(T_q, tq)
    T_k_pad = _round_up(T_k, tkv)

    if T_q_pad != T_q:
        qp = jnp.pad(qp, ((0, 0), (0, T_q_pad - T_q), (0, 0)))
    if T_k_pad != T_k:
        kp = jnp.pad(kp, ((0, 0), (0, T_k_pad - T_k), (0, 0)))
        vp = jnp.pad(vp, ((0, 0), (0, T_k_pad - T_k), (0, 0)))

    kernel = functools.partial(_flash_kernel, hg=hg, d_k=d_k, tkv=tkv,
                               t_k=T_k, mask_kv=(T_k_pad != T_k))

    out = pl.pallas_call(
        kernel,
        out_shape=jax.ShapeDtypeStruct((B, T_q_pad, d_model), jnp.bfloat16),
        grid=(B, num_heads // hg, T_q_pad // tq, T_k_pad // tkv),
        in_specs=[
            pl.BlockSpec((None, tq, gw), lambda b, g, qi, ki: (b, qi, g)),
            pl.BlockSpec((None, tkv, gw), lambda b, g, qi, ki: (b, ki, g)),
            pl.BlockSpec((None, tkv, gw), lambda b, g, qi, ki: (b, ki, g)),
        ],
        out_specs=pl.BlockSpec((None, tq, gw), lambda b, g, qi, ki: (b, qi, g)),
        scratch_shapes=[
            pltpu.VMEM((hg, tq, 1), jnp.float32),   # m (running max)
            pltpu.VMEM((hg, tq, 1), jnp.float32),   # l (running denom)
            pltpu.VMEM((tq, gw), jnp.float32),      # acc (concat-heads layout)
        ],
        compiler_params=pltpu.CompilerParams(
            dimension_semantics=("parallel", "parallel", "parallel", "arbitrary"),
            vmem_limit_bytes=48 * 1024 * 1024),
    )(qp, kp, vp)
    if T_q_pad != T_q:
        out = out[:, :T_q, :]
    return out


# ---------------------------------------------------------------------------
# Parameter setup (PyTorch-style init) + cached weight preparation
# ---------------------------------------------------------------------------
def init_mha_params(key, d_model):
    """PyTorch-style uniform(-1/sqrt(fan_in), 1/sqrt(fan_in)) init."""
    bound = 1.0 / (d_model ** 0.5)
    names = ["q", "k", "v", "out"]
    params = {}
    keys = jax.random.split(key, 2 * len(names))
    for i, name in enumerate(names):
        w = jax.random.uniform(keys[2 * i], (d_model, d_model),
                               minval=-bound, maxval=bound, dtype=jnp.float32)
        b = jax.random.uniform(keys[2 * i + 1], (d_model,),
                               minval=-bound, maxval=bound, dtype=jnp.float32)
        params[name] = (w, b)
    return params


def prepare_mha_params(params, num_heads):
    """One-time prep: transpose / scale / concatenate / bf16-cast the weights so
    the per-call forward path does no weight-side layout or cast work."""
    w_q, b_q = params["q"]
    w_k, b_k = params["k"]
    w_v, b_v = params["v"]
    w_o, b_o = params["out"]
    d_model = w_q.shape[0]
    d_k = d_model // num_heads
    scale = 1.0 / (float(d_k) ** 0.5)

    w_q_s, b_q_s = w_q * scale, b_q * scale          # fold 1/sqrt(d_k) into Q proj
    return {
        "num_heads": num_heads,
        "d_model": d_model,
        # fused QKV (self-attention: same activation for q/k/v)
        "w_qkv_t": jnp.concatenate([w_q_s.T, w_k.T, w_v.T], axis=1).astype(jnp.bfloat16),
        "b_qkv": jnp.concatenate([b_q_s, b_k, b_v]).astype(jnp.float32),
        # fused KV (cross-attention with shared k/v source)
        "w_kv_t": jnp.concatenate([w_k.T, w_v.T], axis=1).astype(jnp.bfloat16),
        "b_kv": jnp.concatenate([b_k, b_v]).astype(jnp.float32),
        # individual projections
        "w_q_t": w_q_s.T.astype(jnp.bfloat16), "b_q": b_q_s.astype(jnp.float32),
        "w_k_t": w_k.T.astype(jnp.bfloat16), "b_k": b_k.astype(jnp.float32),
        "w_v_t": w_v.T.astype(jnp.bfloat16), "b_v": b_v.astype(jnp.float32),
        "w_out_t": w_o.T.astype(jnp.bfloat16), "b_out": b_o.astype(jnp.float32),
    }


def multi_head_attention(prep, q, k, v):
    """Forward pass (eval mode).  q: (B,T_q,d_model), k/v: (B,T_k,d_model) f32."""
    H = prep["num_heads"]
    d_model = prep["d_model"]
    B, T_q, _ = q.shape
    T_k = k.shape[1]

    q2 = q.reshape(B * T_q, d_model)
    k2 = k.reshape(B * T_k, d_model)
    v2 = v.reshape(B * T_k, d_model)

    # Projections write bf16 directly (no separate cast pass).
    if (q is k) and (k is v):
        # Self-attention: single (M,K)x(K,3N) GEMM, activations read once.
        proj = pallas_linear(q2, prep["w_qkv_t"], prep["b_qkv"], out_dtype=jnp.bfloat16)
        qp = proj[:, :d_model]
        kp = proj[:, d_model:2 * d_model]
        vp = proj[:, 2 * d_model:]
    elif k is v:
        qp = pallas_linear(q2, prep["w_q_t"], prep["b_q"], out_dtype=jnp.bfloat16)
        kvp = pallas_linear(k2, prep["w_kv_t"], prep["b_kv"], out_dtype=jnp.bfloat16)
        kp, vp = kvp[:, :d_model], kvp[:, d_model:]
    else:
        qp = pallas_linear(q2, prep["w_q_t"], prep["b_q"], out_dtype=jnp.bfloat16)
        kp = pallas_linear(k2, prep["w_k_t"], prep["b_k"], out_dtype=jnp.bfloat16)
        vp = pallas_linear(v2, prep["w_v_t"], prep["b_v"], out_dtype=jnp.bfloat16)

    # Token-major (B, T, H*d_k) layout goes straight into the flash kernel:
    # head splitting is done by the BlockSpec index maps (no transposes).
    qp = qp.reshape(B, T_q, d_model)
    kp = kp.reshape(B, T_k, d_model)
    vp = vp.reshape(B, T_k, d_model)

    attn = pallas_flash_attention(qp, kp, vp, H)        # (B, T_q, d_model) bf16

    out = pallas_linear(attn.reshape(B * T_q, d_model),
                        prep["w_out_t"], prep["b_out"], out_dtype=jnp.float32)
    return out.reshape(B, T_q, d_model)


# ---------------------------------------------------------------------------
# Pure-JAX f32 reference (PyTorch module semantics) for the correctness check
# ---------------------------------------------------------------------------
def mha_reference(params, q, k, v, num_heads):
    B, T_q, d_model = q.shape
    d_k = d_model // num_heads

    def lin(x, name):
        w, b = params[name]
        return x @ w.T + b

    def split(x):
        B_, T_, _ = x.shape
        return x.reshape(B_, T_, num_heads, d_k).transpose(0, 2, 1, 3)

    qh, kh, vh = split(lin(q, "q")), split(lin(k, "k")), split(lin(v, "v"))
    scores = jnp.einsum("bhqd,bhkd->bhqk", qh, kh) / (d_k ** 0.5)
    attn = jax.nn.softmax(scores, axis=-1)
    out = jnp.einsum("bhqk,bhkd->bhqd", attn, vh)
    out = out.transpose(0, 2, 1, 3).reshape(B, T_q, d_model)
    return lin(out, "out")


if __name__ == "__main__":
    B, T, d_model, num_heads = 2, 8, 32, 4

    key = jax.random.PRNGKey(0)
    k_param, k_q, k_k, k_v = jax.random.split(key, 4)

    params = init_mha_params(k_param, d_model)
    prep = prepare_mha_params(params, num_heads)          # cached weight prep

    q = jax.random.normal(k_q, (B, T, d_model), dtype=jnp.float32)
    k = jax.random.normal(k_k, (B, T, d_model), dtype=jnp.float32)
    v = jax.random.normal(k_v, (B, T, d_model), dtype=jnp.float32)

    # General (distinct q/k/v) path.
    out = jax.block_until_ready(multi_head_attention(prep, q, k, v))
    ref = mha_reference(params, q, k, v, num_heads)
    assert out.shape == (B, T, d_model)
    assert jnp.allclose(out, ref, atol=3e-2, rtol=3e-2), "mismatch vs reference"

    # Self-attention path (exercises the fused QKV GEMM).
    out_self = jax.block_until_ready(multi_head_attention(prep, q, q, q))
    ref_self = mha_reference(params, q, q, q, num_heads)
    assert jnp.allclose(out_self, ref_self, atol=3e-2, rtol=3e-2), "self-attn mismatch"

    print("KERNEL_OK")
</pallas_src>

<mosaic_0001>
module attributes {stable_mosaic.version = 11 : i64} {
  func.func @_linear_kernel(%arg0: i32, %arg1: i32, %arg2: i32, %arg3: memref<16x128xbf16, #tpu.memory_space<vmem>>, %arg4: memref<128x128xbf16, #tpu.memory_space<vmem>>, %arg5: memref<1x128xf32, #tpu.memory_space<vmem>>, %arg6: memref<16x128xbf16, #tpu.memory_space<vmem>>, %arg7: memref<16x128xf32, #tpu.memory_space<vmem>>) attributes {dimension_semantics = [#tpu.dimension_semantics<parallel>, #tpu.dimension_semantics<parallel>, #tpu.dimension_semantics<arbitrary>], iteration_bounds = array<i64: 1, 1, 1>, scalar_prefetch = 0 : i64, scratch_operands = 1 : i64, tpu.core_type = #tpu.core_type<tc>, window_params = [{transform_indices = @transform_0, window_bounds = array<i64: 16, 128>}, {transform_indices = @transform_1, window_bounds = array<i64: 128, 128>}, {transform_indices = @transform_2, window_bounds = array<i64: 1, 128>}, {transform_indices = @transform_3, window_bounds = array<i64: 16, 128>}]} {
    %c0_i32 = arith.constant 0 : i32
    %0 = arith.cmpi eq, %arg2, %c0_i32 : i32
    %1 = arith.extui %0 : i1 to i32
    %c0_i32_0 = arith.constant 0 : i32
    %2 = arith.cmpi ne, %1, %c0_i32_0 : i32
    scf.if %2 {
      %cst_10 = arith.constant 0.000000e+00 : f32
      %12 = vector.broadcast %cst_10 : f32 to vector<16x128xf32>
      %c0_11 = arith.constant 0 : index
      %c0_12 = arith.constant 0 : index
      %13 = vector.load %arg7[%c0_11, %c0_12] : memref<16x128xf32, #tpu.memory_space<vmem>>, vector<16x128xf32>
      tpu.vector_store %arg7[%c0_11, %c0_12], %12 {strides = array<i32>} : memref<16x128xf32, #tpu.memory_space<vmem>>, vector<16x128xf32>,
    } else {
    }
    %c0 = arith.constant 0 : index
    %c0_1 = arith.constant 0 : index
    %3 = vector.load %arg7[%c0, %c0_1] : memref<16x128xf32, #tpu.memory_space<vmem>>, vector<16x128xf32>
    %c0_2 = arith.constant 0 : index
    %c0_3 = arith.constant 0 : index
    %4 = vector.load %arg3[%c0_2, %c0_3] : memref<16x128xbf16, #tpu.memory_space<vmem>>, vector<16x128xbf16>
    %c0_4 = arith.constant 0 : index
    %c0_5 = arith.constant 0 : index
    %5 = vector.load %arg4[%c0_4, %c0_5] : memref<128x128xbf16, #tpu.memory_space<vmem>>, vector<128x128xbf16>
    %cst = arith.constant dense<0.000000e+00> : vector<16x128xf32>
    %6 = tpu.matmul %4, %5, %cst {dimension_numbers = #tpu.dot_dimension_numbers<[1], [0], [0], [1], [0, 0, 1, 1], [], []>} : vector<16x128xbf16>, vector<128x128xbf16>, vector<16x128xf32> -> vector<16x128xf32>
    %7 = arith.addf %3, %6 : vector<16x128xf32>
    %c0_6 = arith.constant 0 : index
    %c0_7 = arith.constant 0 : index
    %8 = vector.load %arg7[%c0_6, %c0_7] : memref<16x128xf32, #tpu.memory_space<vmem>>, vector<16x128xf32>
    tpu.vector_store %arg7[%c0_6, %c0_7], %7 {strides = array<i32>} : memref<16x128xf32, #tpu.memory_space<vmem>>, vector<16x128xf32>,
    %c0_i32_8 = arith.constant 0 : i32
    %9 = arith.cmpi eq, %arg2, %c0_i32_8 : i32
    %10 = arith.extui %9 : i1 to i32
    %c0_i32_9 = arith.constant 0 : i32
    %11 = arith.cmpi ne, %10, %c0_i32_9 : i32
    scf.if %11 {
      %c0_10 = arith.constant 0 : index
      %c0_11 = arith.constant 0 : index
      %12 = vector.load %arg7[%c0_10, %c0_11] : memref<16x128xf32, #tpu.memory_space<vmem>>, vector<16x128xf32>
      %c0_12 = arith.constant 0 : index
      %c0_13 = arith.constant 0 : index
      %13 = vector.load %arg5[%c0_12, %c0_13] : memref<1x128xf32, #tpu.memory_space<vmem>>, vector<1x128xf32>
      %14 = vector.broadcast %13 : vector<1x128xf32> to vector<16x128xf32>
      %15 = arith.addf %12, %14 : vector<16x128xf32>
      %16 = arith.truncf %15 : vector<16x128xf32> to vector<16x128xbf16>
      %c0_14 = arith.constant 0 : index
      %c0_15 = arith.constant 0 : index
      %17 = vector.load %arg6[%c0_14, %c0_15] : memref<16x128xbf16, #tpu.memory_space<vmem>>, vector<16x128xbf16>
      tpu.vector_store %arg6[%c0_14, %c0_15], %16 {strides = array<i32>} : memref<16x128xbf16, #tpu.memory_space<vmem>>, vector<16x128xbf16>,
    } else {
    }
    return
  }
  func.func @transform_0(%arg0: i32, %arg1: i32, %arg2: i32) -> (i32, i32) {
    %c0_i32 = arith.constant 0 : i32
    return %arg0, %arg2 : i32, i32
  }
  func.func @transform_1(%arg0: i32, %arg1: i32, %arg2: i32) -> (i32, i32) {
    %c0_i32 = arith.constant 0 : i32
    return %arg2, %arg1 : i32, i32
  }
  func.func @transform_2(%arg0: i32, %arg1: i32, %arg2: i32) -> (i32, i32) {
    %c0_i32 = arith.constant 0 : i32
    %c0_i32_0 = arith.constant 0 : i32
    return %c0_i32, %arg1 : i32, i32
  }
  func.func @transform_3(%arg0: i32, %arg1: i32, %arg2: i32) -> (i32, i32) {
    %c0_i32 = arith.constant 0 : i32
    return %arg0, %arg1 : i32, i32
  }
}

</mosaic_0001>

<llo_original>
// kernel: tpu_custom_call.1
$region0: #{tpu_custom_call.1}
  #allocation0 [shape = 'u32[]', space=smem, size = 0x4, offset = 0x4, fixed_abs, tag = 'smem constant byte address 0x4 - core index']
  #allocation1 [shape = 'u32[144,128]{1,0:T(1,128)}', space=vmem, size = 0x12000, scoped, tag = 'internal scratch']
  #allocation2 [shape = 'f32[16,128]{1,0:T(8,128)}', space=vmem, size = 0x2000, scoped, tag = 'scratch operand']
  %s0 = inlined_call_operand.hbm [shape: bf16[16,128], index: 0, kind: input, shape index: {}]
  %s1 = inlined_call_operand.hbm [shape: bf16[128,128], index: 1, kind: input, shape index: {}]
  %s2 = inlined_call_operand.vmem [shape: f32[1,128], index: 2, kind: input, shape index: {}]
  %s3 = inlined_call_operand.hbm [shape: bf16[16,128], index: 3, kind: output, shape index: {}]
  %s4 = sld [smem:[#allocation0]]
  $region38: #{tpu_custom_call.1} parent=0
    _
  %s6 = ssub.s32 1, %s4
  %s7 = scalar_select 0, %s6, %s4
  $region1: #{tpu_custom_call.1} parent=0
    #allocation3 [shape = 'u8[4096]{0}', space=vmem, size = 0x1000, scoped, tag = 'input window, operand 0, single buffered']
    #allocation4 [shape = 's32[1]{0}', space=sflag, size = 0x4, scoped, tag = 'scoped memory for tpu_custom_call.1']
    #allocation5 [shape = 's32[1]{0}', space=sflag, size = 0x4, scoped, tag = 'scoped memory for tpu_custom_call.1']
    #allocation6 [shape = 'u8[32768]{0}', space=vmem, size = 0x8000, scoped, tag = 'input window, operand 1, single buffered']
    #allocation7 [shape = 's32[1]{0}', space=sflag, size = 0x4, scoped, tag = 'scoped memory for tpu_custom_call.1']
    #allocation8 [shape = 'u8[4096]{0}', space=vmem, size = 0x1000, scoped, tag = 'output window, operand 0, single buffered']
    %8 = vsyncpa [#allocation4], 0
    %9 = vsyncpa [#allocation7], 0
    %10 = vsyncpa [#allocation5], 0
    // Predicated region
    $region2: #{tpu_custom_call.1} parent=1 // pred_check
      _
    $region3: #{tpu_custom_call.1} parent=1 // pred_check_branch
      %12 = sbr.rel (0) target = $region5
    $region4: #{tpu_custom_call.1} parent=1 // pred_region
      %s14 = ssub.s32 128, 128
      %15 = vsyncadd [#allocation4], %s14
      %s16 = sshll.u32 [#allocation3], 4
      %s17 = int_to_ptr.vmem [resolvable:$true] %s16
      %22 = dma.hbm_to_vmem [thread:$0]  %s0, 128, %s17, [#allocation4], 64, 64, 4
    $region5: #{tpu_custom_call.1} parent=1 // pred_fallthru
      _
    // Predicated region
    $region6: #{tpu_custom_call.1} parent=1 // pred_check
      _
    $region7: #{tpu_custom_call.1} parent=1 // pred_check_branch
      %24 = sbr.rel (0) target = $region9
    $region8: #{tpu_custom_call.1} parent=1 // pred_region
      %s26 = ssub.s32 1024, 1024
      %27 = vsyncadd [#allocation7], %s26
      %s28 = sshll.u32 [#allocation6], 4
      %s29 = int_to_ptr.vmem [resolvable:$true] %s28
      %34 = dma.hbm_to_vmem [thread:$0]  %s1, 1024, %s29, [#allocation7], 64, 64, 4
    $region9: #{tpu_custom_call.1} parent=1 // pred_fallthru
      _
    // Predicated region
    $region10: #{tpu_custom_call.1} parent=1 // pred_check
      _
    $region11: #{tpu_custom_call.1} parent=1 // pred_check_branch
      %36 = sbr.rel (0) target = $region13
    $region12: #{tpu_custom_call.1} parent=1 // pred_region
      _
    $region13: #{tpu_custom_call.1} parent=1 // pred_fallthru
      _
    // Predicated region
    $region14: #{tpu_custom_call.1} parent=1 // pred_check
      _
    $region15: #{tpu_custom_call.1} parent=1 // pred_check_branch
      %38 = sbr.rel (0) target = $region17
    $region16: #{tpu_custom_call.1} parent=1 // pred_region
      %39 = dma.done [#allocation4], 128
    $region17: #{tpu_custom_call.1} parent=1 // pred_fallthru
      _
    // Predicated region
    $region18: #{tpu_custom_call.1} parent=1 // pred_check
      _
    $region19: #{tpu_custom_call.1} parent=1 // pred_check_branch
      %41 = sbr.rel (0) target = $region21
    $region20: #{tpu_custom_call.1} parent=1 // pred_region
      %42 = dma.done [#allocation7], 1024
    $region21: #{tpu_custom_call.1} parent=1 // pred_fallthru
      _
    %p44 = scmp.eq.s32.totalorder 0, 0
    // Predicated region
    $region22: #{tpu_custom_call.1} parent=1 // pred_check
      %p45 = pneg %p44
    $region23: #{tpu_custom_call.1} parent=1 // pred_check_branch
      %47 = sbr.rel (%p45) target = $region25
    $region24: #{tpu_custom_call.1} parent=1 // pred_region
      %48 = vst [vmem:[#allocation2] sm:$0xff] 0.0
      %49 = vst [vmem:[#allocation2 + $0x8] sm:$0xff] 0.0
    $region25: #{tpu_custom_call.1} parent=1 // pred_fallthru
      _
    %v50 = vld [vmem:[#allocation2] sm:$0xff]
    %v51 = vld [vmem:[#allocation2 + $0x8] sm:$0xff]
    %v52 = vld [vmem:[#allocation3] sm:$0xf]
    %v53 = vld [vmem:[#allocation3 + $0x4] sm:$0xf]
    %v54 = vld [vmem:[#allocation6] sm:$0xf]
    %v55 = vld [vmem:[#allocation6 + $0x4] sm:$0xf]
    %v56 = vld [vmem:[#allocation6 + $0x8] sm:$0xf]
    %v57 = vld [vmem:[#allocation6 + $0xc] sm:$0xf]
    %v58 = vld [vmem:[#allocation6 + $0x10] sm:$0xf]
    %v59 = vld [vmem:[#allocation6 + $0x14] sm:$0xf]
    %v60 = vld [vmem:[#allocation6 + $0x18] sm:$0xf]
    %v61 = vld [vmem:[#allocation6 + $0x1c] sm:$0xf]
    %v62 = vld [vmem:[#allocation6 + $0x20] sm:$0xf]
    %v63 = vld [vmem:[#allocation6 + $0x24] sm:$0xf]
    %v64 = vld [vmem:[#allocation6 + $0x28] sm:$0xf]
    %v65 = vld [vmem:[#allocation6 + $0x2c] sm:$0xf]
    %v66 = vld [vmem:[#allocation6 + $0x30] sm:$0xf]
    %v67 = vld [vmem:[#allocation6 + $0x34] sm:$0xf]
    %v68 = vld [vmem:[#allocation6 + $0x38] sm:$0xf]
    %v69 = vld [vmem:[#allocation6 + $0x3c] sm:$0xf]
    %v72 = vunpack.c.l.b16 %v52
    %v73 = vunpack.c.l.b16 %v53
    %v74 = vpack.c.b16 %v73, %v72
    %v92 = vunpack.c.l.b16 %v54
    %v93 = vunpack.c.l.b16 %v55
    %v94 = vunpack.c.l.b16 %v56
    %v95 = vunpack.c.l.b16 %v57
    %v96 = vunpack.c.l.b16 %v58
    %v97 = vunpack.c.l.b16 %v59
    %v98 = vunpack.c.l.b16 %v60
    %v99 = vunpack.c.l.b16 %v61
    %v100 = vunpack.c.l.b16 %v62
    %v101 = vunpack.c.l.b16 %v63
    %v102 = vunpack.c.l.b16 %v64
    %v103 = vunpack.c.l.b16 %v65
    %v104 = vunpack.c.l.b16 %v66
    %v105 = vunpack.c.l.b16 %v67
    %v106 = vunpack.c.l.b16 %v68
    %v107 = vunpack.c.l.b16 %v69
    %v108 = vpack.c.b16 %v93, %v92
    %v109 = vpack.c.b16 %v95, %v94
    %v110 = vpack.c.b16 %v97, %v96
    %v111 = vpack.c.b16 %v99, %v98
    %v112 = vpack.c.b16 %v101, %v100
    %v113 = vpack.c.b16 %v103, %v102
    %v114 = vpack.c.b16 %v105, %v104
    %v115 = vpack.c.b16 %v107, %v106
    %124 = vmatprep.subr.bf16.mxu0 0
    %125 = vmatpush1.bf16.msra.mxu0 %v115
    %126 = vmatprep.subr.bf16.mxu0 0
    %127 = vmatpush1.bf16.msra.mxu0 %v114
    %128 = vmatprep.subr.bf16.mxu0 0
    %129 = vmatpush1.bf16.msra.mxu0 %v113
    %130 = vmatprep.subr.bf16.mxu0 0
    %131 = vmatpush1.bf16.msra.mxu0 %v112
    %132 = vmatprep.subr.bf16.mxu0 0
    %133 = vmatpush1.bf16.msra.mxu0 %v111
    %134 = vmatprep.subr.bf16.mxu0 0
    %135 = vmatpush1.bf16.msra.mxu0 %v110
    %136 = vmatprep.subr.bf16.mxu0 0
    %137 = vmatpush1.bf16.msra.mxu0 %v109
    %138 = vmatprep.subr.bf16.mxu0 0
    %139 = vmatpush1.bf16.msra.mxu0 %v108
    %140 = vmatprep.subr.bf16.mxu0 0
    %141 = vmatpush2.bf16.msra.mxu0 0
    %142 = vmatprep.subr.bf16.mxu0 0
    %143 = vmatpush2.bf16.msra.mxu0 0
    %144 = vmatprep.subr.bf16.mxu0 0
    %145 = vmatpush2.bf16.msra.mxu0 0
    %146 = vmatprep.subr.bf16.mxu0 0
    %147 = vmatpush2.bf16.msra.mxu0 0
    %148 = vmatprep.subr.bf16.mxu0 0
    %149 = vmatpush2.bf16.msra.mxu0 0
    %150 = vmatprep.subr.bf16.mxu0 0
    %151 = vmatpush2.bf16.msra.mxu0 0
    %152 = vmatprep.subr.bf16.mxu0 0
    %153 = vmatpush2.bf16.msra.mxu0 0
    %154 = vmatprep.subr.bf16.mxu0 0
    %155 = vmatpush2.bf16.msra.mxu0 0
    %156 = vmatprep.mubr.bf16.mxu0 0
    %157 = vmatmul.mubr.bf16.gmra.mxu0 %v74
    %v158 = vpop.f32.mrf.mxu0
    %v159 = vadd.f32 0.0, %v158
    %v160 = vpop.f32.mrf.mxu0
    %v161 = vpop.f32.mrf.mxu0
    %v162 = vadd.f32 0.0, %v161
    %v163 = vpop.f32.mrf.mxu0
    %164 = vdwg.mxu0
    %v165 = vadd.f32 %v50, %v159
    %v166 = vadd.f32 %v51, %v162
    %167 = vst [vmem:[#allocation2] sm:$0xff] %v165
    %168 = vst [vmem:[#allocation2 + $0x8] sm:$0xff] %v166
    // Predicated region
    $region26: #{tpu_custom_call.1} parent=1 // pred_check
      %p169 = pneg %p44
    $region27: #{tpu_custom_call.1} parent=1 // pred_check_branch
      %171 = sbr.rel (%p169) target = $region29
    $region28: #{tpu_custom_call.1} parent=1 // pred_region
      %v172 = vld [vmem:[#allocation2] sm:$0xff]
      %v173 = vld [vmem:[#allocation2 + $0x8] sm:$0xff]
      %v174 = vld [vmem:[%s2] sm:$0x1]
      %v176 = vlaneseq
      %v177 = vshrl.u32 %v176, 7
      %v178 = vsub.s32 0, %v177
      %v179 = vrot.slane %v174, %v178
      %v181 = vadd.f32 %v172, %v179
      %v182 = vadd.f32 %v173, %v179
      %v183 = vpack.c.bf16 %v182, %v181
      %v185 = vunpack.c.l.b16 %v183
      %v186 = vunpack.c.h.b16 %v183
      %v187 = vpack.c.b16 %v185, %v185
      %v188 = vpack.c.b16 %v186, %v186
      %191 = vst [vmem:[#allocation8] sm:$0xf] %v187
      %192 = vst [vmem:[#allocation8 + $0x4] sm:$0xf] %v188
    $region29: #{tpu_custom_call.1} parent=1 // pred_fallthru
      _
    // Predicated region
    $region30: #{tpu_custom_call.1} parent=1 // pred_check
      _
    $region31: #{tpu_custom_call.1} parent=1 // pred_check_branch
      %194 = sbr.rel (0) target = $region33
    $region32: #{tpu_custom_call.1} parent=1 // pred_region
      %s196 = ssub.s32 128, 128
      %197 = vsyncadd [#allocation5], %s196
      %s198 = sshll.u32 [#allocation8], 4
      %s199 = int_to_ptr.vmem [resolvable:$true] %s198
      %204 = dma.vmem_to_hbm [thread:$0]  %s199, 128, %s3, [#allocation5], 64, 64, 4
    $region33: #{tpu_custom_call.1} parent=1 // pred_fallthru
      _
    // Predicated region
    $region34: #{tpu_custom_call.1} parent=1 // pred_check
      _
    $region35: #{tpu_custom_call.1} parent=1 // pred_check_branch
      %206 = sbr.rel (0) target = $region37
    $region36: #{tpu_custom_call.1} parent=1 // pred_region
      %207 = dma.done [#allocation5], 128
    $region37: #{tpu_custom_call.1} parent=1 // pred_fallthru
      _
    %208 = vsyncpa [#allocation4], 1
    %209 = vsyncpa [#allocation7], 1
    %210 = vsyncpa [#allocation5], 1

</llo_original>
